<compile_context>
chip_gen: v5e
topology: v5e:2x2
jax: 0.10.0
libtpu: 0.0.40
codegen_flags: <defaults>
</compile_context>

<pallas_src>
import jax
import jax.numpy as jnp
import numpy as np
from jax.experimental import pallas as pl
from jax.experimental.pallas import tpu as pltpu

# ---------------- problem sizes (synthetic env) ----------------
N_OBS = 16          # env.observation_space.shape[0]
N_ACT = 4           # env.action_space.n
HID = 16
D_IN = N_OBS + N_ACT

TB = 128            # batch tile (lanes per grid step); multiple of 128 on all gens

# packed parameter slab layout (rows x cols), f32:
#   rows  0:16, cols  0:20 -> W1 (16 x 20)  [cols 0:16 act on s, cols 16:20 on one_hot(a)]
#   rows 16:32, cols  0:16 -> W2
#   rows 32:48, cols  0:16 -> W3
#   rows 48:64, cols  0:16 -> W4
#   rows  0:16, col  20+l  -> b_{l+1}, l = 0..3   (stored as columns -> lane-broadcast)
#   rows  0:16, col  24    -> W5[0, :] (as a column)
#   row   0,    col  25    -> b5
SLAB_R, SLAB_C = 64, 26


# ---------------- Pallas kernel: 5-layer MLP, batch on lanes ----------------
def q_mlp_kernel(a_ref, st_ref, p_ref, o_ref):
    # a_ref : (1, TB)  int32      action ids
    # st_ref: (N_OBS, TB) f32     states transposed (features x batch)
    # p_ref : (SLAB_R, SLAB_C)    packed parameters
    # o_ref : (1, TB)  f32        lane-dense output
    p = p_ref[...]
    w1s = p[0:HID, 0:N_OBS]              # (16, 16)
    w1a = p[0:HID, N_OBS:N_OBS + N_ACT]  # (16, 4)
    w2 = p[16:32, 0:HID]
    w3 = p[32:48, 0:HID]
    w4 = p[48:64, 0:HID]
    b1 = p[0:HID, 20:21]
    b2 = p[0:HID, 21:22]
    b3 = p[0:HID, 22:23]
    b4 = p[0:HID, 23:24]
    w5c = p[0:HID, 24:25]                # (16, 1) == W5^T
    b5 = p[0:1, 25:26]                   # (1, 1)

    a = a_ref[...]                       # (1, TB) int32
    tb = a.shape[1]
    onehot = (jax.lax.broadcasted_iota(jnp.int32, (N_ACT, tb), 0) == a
              ).astype(jnp.float32)      # (4, TB)

    st = st_ref[...]                     # (16, TB)
    h = (jnp.dot(w1s, st, preferred_element_type=jnp.float32)
         + jnp.dot(w1a, onehot, preferred_element_type=jnp.float32) + b1)
    h = jnp.maximum(h, 0.0)
    h = jnp.maximum(jnp.dot(w2, h, preferred_element_type=jnp.float32) + b2, 0.0)
    h = jnp.maximum(jnp.dot(w3, h, preferred_element_type=jnp.float32) + b3, 0.0)
    h = jnp.maximum(jnp.dot(w4, h, preferred_element_type=jnp.float32) + b4, 0.0)
    # last layer (16 -> 1): elementwise mul + sublane reduce (avoids a degenerate matmul)
    o_ref[...] = jnp.sum(w5c * h, axis=0, keepdims=True) + b5


# ---------------- one-time parameter packing (PyTorch (out,in) convention) ----------------
def pack_params(params):
    (w1, b1), (w2, b2), (w3, b3), (w4, b4), (w5, b5) = params
    slab = jnp.zeros((SLAB_R, SLAB_C), jnp.float32)
    slab = slab.at[0:HID, 0:D_IN].set(w1)
    slab = slab.at[16:32, 0:HID].set(w2)
    slab = slab.at[32:48, 0:HID].set(w3)
    slab = slab.at[48:64, 0:HID].set(w4)
    slab = slab.at[0:HID, 20].set(b1)
    slab = slab.at[0:HID, 21].set(b2)
    slab = slab.at[0:HID, 22].set(b3)
    slab = slab.at[0:HID, 23].set(b4)
    slab = slab.at[0:HID, 24].set(w5[0, :])
    slab = slab.at[0, 25].set(b5[0])
    return slab


# ---------------- batched forward ----------------
@jax.jit
def q_forward_batch(s_batch, a_batch, pslab):
    """s_batch: (B, N_OBS) f32, a_batch: (B,) int. Returns (B,) Q-values."""
    B = s_batch.shape[0]
    Bp = TB * pl.cdiv(B, TB)
    pad = Bp - B
    s_p = jnp.pad(s_batch.astype(jnp.float32), ((0, pad), (0, 0)))
    a_p = jnp.pad(a_batch.astype(jnp.int32), ((0, pad),))
    st = s_p.T                    # (N_OBS, Bp)
    a2 = a_p.reshape(1, Bp)       # (1, Bp)

    flops_per_sample = 2 * (N_OBS * HID + N_ACT * HID) + 3 * 2 * HID * HID + 2 * HID
    cost = pl.CostEstimate(
        flops=flops_per_sample * Bp,
        transcendentals=0,
        bytes_accessed=4 * ((N_OBS + 2) * Bp + SLAB_R * SLAB_C),
    )

    out = pl.pallas_call(
        q_mlp_kernel,
        out_shape=jax.ShapeDtypeStruct((1, Bp), jnp.float32),
        grid=(Bp // TB,),
        in_specs=[
            pl.BlockSpec((1, TB), lambda i: (0, i)),           # actions
            pl.BlockSpec((N_OBS, TB), lambda i: (0, i)),       # states^T
            pl.BlockSpec((SLAB_R, SLAB_C), lambda i: (0, 0)),  # packed params (resident)
        ],
        out_specs=pl.BlockSpec((1, TB), lambda i: (0, i)),
        compiler_params=pltpu.CompilerParams(dimension_semantics=("parallel",)),
        cost_estimate=cost,
    )(a2, st, pslab)
    return out[0, :B]


def q_forward(s, a, pslab):
    """Matches PyTorch Q.forward(s, a): s (N_OBS,), a scalar int -> shape (1,)."""
    return q_forward_batch(s.reshape(1, N_OBS),
                           jnp.reshape(jnp.asarray(a, jnp.int32), (1,)), pslab)


# ---------------- deterministic parameter init (PyTorch-style uniform) ----------------
def init_params(key):
    shapes = [(HID, D_IN), (HID, HID), (HID, HID), (HID, HID), (1, HID)]
    params = []
    for shp in shapes:
        fan_in = shp[1]
        bound = 1.0 / np.sqrt(fan_in)
        key, kw, kb = jax.random.split(key, 3)
        w = jax.random.uniform(kw, shp, jnp.float32, -bound, bound)
        b = jax.random.uniform(kb, (shp[0],), jnp.float32, -bound, bound)
        params.append((w, b))
    return params


# ---------------- pure-JAX reference ----------------
def q_forward_ref(s_batch, a_batch, params):
    onehot = jnp.eye(N_ACT, dtype=jnp.float32)[a_batch]
    x = jnp.concatenate((s_batch, onehot), axis=-1)
    (w1, b1), (w2, b2), (w3, b3), (w4, b4), (w5, b5) = params
    h = jnp.maximum(x @ w1.T + b1, 0.0)
    h = jnp.maximum(h @ w2.T + b2, 0.0)
    h = jnp.maximum(h @ w3.T + b3, 0.0)
    h = jnp.maximum(h @ w4.T + b4, 0.0)
    return (h @ w5.T + b5)[:, 0]


if __name__ == "__main__":
    key = jax.random.PRNGKey(0)
    key, ks, ka = jax.random.split(key, 3)
    params = init_params(key)
    pslab = pack_params(params)            # one-time parameter prep (no per-call transposes)

    B = 256                                # 2 batch tiles -> grid=(2,)
    s_batch = jax.random.normal(ks, (B, N_OBS), jnp.float32)
    a_batch = jax.random.randint(ka, (B,), 0, N_ACT, jnp.int32)

    out = q_forward_batch(s_batch, a_batch, pslab)
    jax.block_until_ready(out)

    ref = q_forward_ref(s_batch, a_batch, params)
    assert out.shape == (B,)
    np.testing.assert_allclose(np.asarray(out), np.asarray(ref), rtol=1e-5, atol=1e-5)

    # single-sample path matches the original module's forward(s, a) -> (1,)
    out1 = q_forward(s_batch[3], a_batch[3], pslab)
    jax.block_until_ready(out1)
    assert out1.shape == (1,)
    np.testing.assert_allclose(np.asarray(out1)[0], np.asarray(ref)[3], rtol=1e-5, atol=1e-5)

    print("KERNEL_OK")
</pallas_src>

<mosaic_0001>
module attributes {stable_mosaic.version = 11 : i64} {
  func.func @q_mlp_kernel(%arg0: i32, %arg1: memref<1x128xi32, #tpu.memory_space<vmem>>, %arg2: memref<16x128xf32, #tpu.memory_space<vmem>>, %arg3: memref<64x26xf32, #tpu.memory_space<vmem>>, %arg4: memref<1x128xf32, #tpu.memory_space<vmem>>) attributes {dimension_semantics = [#tpu.dimension_semantics<parallel>], iteration_bounds = array<i64: 2>, scalar_prefetch = 0 : i64, scratch_operands = 0 : i64, tpu.core_type = #tpu.core_type<tc>, window_params = [{transform_indices = @transform_0, window_bounds = array<i64: 1, 128>}, {transform_indices = @transform_1, window_bounds = array<i64: 16, 128>}, {pipeline_mode = #tpu.pipeline_mode<synchronous>, transform_indices = @transform_2, window_bounds = array<i64: 64, 26>}, {transform_indices = @transform_3, window_bounds = array<i64: 1, 128>}]} {
    %c0 = arith.constant 0 : index
    %c0_0 = arith.constant 0 : index
    %0 = vector.load %arg3[%c0, %c0_0] : memref<64x26xf32, #tpu.memory_space<vmem>>, vector<64x26xf32>
    %1 = vector.extract_strided_slice %0 {offsets = [0, 0], sizes = [16, 16], strides = [1, 1]} : vector<64x26xf32> to vector<16x16xf32>
    %2 = vector.extract_strided_slice %0 {offsets = [0, 16], sizes = [16, 4], strides = [1, 1]} : vector<64x26xf32> to vector<16x4xf32>
    %3 = vector.extract_strided_slice %0 {offsets = [16, 0], sizes = [16, 16], strides = [1, 1]} : vector<64x26xf32> to vector<16x16xf32>
    %4 = vector.extract_strided_slice %0 {offsets = [32, 0], sizes = [16, 16], strides = [1, 1]} : vector<64x26xf32> to vector<16x16xf32>
    %5 = vector.extract_strided_slice %0 {offsets = [48, 0], sizes = [16, 16], strides = [1, 1]} : vector<64x26xf32> to vector<16x16xf32>
    %6 = vector.extract_strided_slice %0 {offsets = [0, 20], sizes = [16, 1], strides = [1, 1]} : vector<64x26xf32> to vector<16x1xf32>
    %7 = vector.extract_strided_slice %0 {offsets = [0, 21], sizes = [16, 1], strides = [1, 1]} : vector<64x26xf32> to vector<16x1xf32>
    %8 = vector.extract_strided_slice %0 {offsets = [0, 22], sizes = [16, 1], strides = [1, 1]} : vector<64x26xf32> to vector<16x1xf32>
    %9 = vector.extract_strided_slice %0 {offsets = [0, 23], sizes = [16, 1], strides = [1, 1]} : vector<64x26xf32> to vector<16x1xf32>
    %10 = vector.extract_strided_slice %0 {offsets = [0, 24], sizes = [16, 1], strides = [1, 1]} : vector<64x26xf32> to vector<16x1xf32>
    %11 = vector.extract_strided_slice %0 {offsets = [0, 25], sizes = [1, 1], strides = [1, 1]} : vector<64x26xf32> to vector<1x1xf32>
    %c0_1 = arith.constant 0 : index
    %c0_2 = arith.constant 0 : index
    %12 = vector.load %arg1[%c0_1, %c0_2] : memref<1x128xi32, #tpu.memory_space<vmem>>, vector<1x128xi32>
    %13 = tpu.iota {dimensions = array<i32: 0>} : vector<4x128xi32>
    %14 = vector.broadcast %12 : vector<1x128xi32> to vector<4x128xi32>
    %15 = arith.cmpi eq, %13, %14 : vector<4x128xi32>
    %16 = arith.extui %15 : vector<4x128xi1> to vector<4x128xi32>
    %17 = arith.sitofp %16 : vector<4x128xi32> to vector<4x128xf32>
    %c0_3 = arith.constant 0 : index
    %c0_4 = arith.constant 0 : index
    %18 = vector.load %arg2[%c0_3, %c0_4] : memref<16x128xf32, #tpu.memory_space<vmem>>, vector<16x128xf32>
    %cst = arith.constant dense<0.000000e+00> : vector<16x128xf32>
    %19 = tpu.matmul %1, %18, %cst {dimension_numbers = #tpu.dot_dimension_numbers<[1], [0], [0], [1], [0, 0, 1, 1], [], []>} : vector<16x16xf32>, vector<16x128xf32>, vector<16x128xf32> -> vector<16x128xf32>
    %cst_5 = arith.constant dense<0.000000e+00> : vector<16x128xf32>
    %20 = tpu.matmul %2, %17, %cst_5 {dimension_numbers = #tpu.dot_dimension_numbers<[1], [0], [0], [1], [0, 0, 1, 1], [], []>} : vector<16x4xf32>, vector<4x128xf32>, vector<16x128xf32> -> vector<16x128xf32>
    %21 = arith.addf %19, %20 : vector<16x128xf32>
    %22 = vector.broadcast %6 : vector<16x1xf32> to vector<16x128xf32>
    %23 = arith.addf %21, %22 : vector<16x128xf32>
    %cst_6 = arith.constant 0.000000e+00 : f32
    %24 = vector.broadcast %cst_6 : f32 to vector<16x128xf32>
    %25 = arith.maximumf %23, %24 : vector<16x128xf32>
    %cst_7 = arith.constant dense<0.000000e+00> : vector<16x128xf32>
    %26 = tpu.matmul %3, %25, %cst_7 {dimension_numbers = #tpu.dot_dimension_numbers<[1], [0], [0], [1], [0, 0, 1, 1], [], []>} : vector<16x16xf32>, vector<16x128xf32>, vector<16x128xf32> -> vector<16x128xf32>
    %27 = vector.broadcast %7 : vector<16x1xf32> to vector<16x128xf32>
    %28 = arith.addf %26, %27 : vector<16x128xf32>
    %cst_8 = arith.constant 0.000000e+00 : f32
    %29 = vector.broadcast %cst_8 : f32 to vector<16x128xf32>
    %30 = arith.maximumf %28, %29 : vector<16x128xf32>
    %cst_9 = arith.constant dense<0.000000e+00> : vector<16x128xf32>
    %31 = tpu.matmul %4, %30, %cst_9 {dimension_numbers = #tpu.dot_dimension_numbers<[1], [0], [0], [1], [0, 0, 1, 1], [], []>} : vector<16x16xf32>, vector<16x128xf32>, vector<16x128xf32> -> vector<16x128xf32>
    %32 = vector.broadcast %8 : vector<16x1xf32> to vector<16x128xf32>
    %33 = arith.addf %31, %32 : vector<16x128xf32>
    %cst_10 = arith.constant 0.000000e+00 : f32
    %34 = vector.broadcast %cst_10 : f32 to vector<16x128xf32>
    %35 = arith.maximumf %33, %34 : vector<16x128xf32>
    %cst_11 = arith.constant dense<0.000000e+00> : vector<16x128xf32>
    %36 = tpu.matmul %5, %35, %cst_11 {dimension_numbers = #tpu.dot_dimension_numbers<[1], [0], [0], [1], [0, 0, 1, 1], [], []>} : vector<16x16xf32>, vector<16x128xf32>, vector<16x128xf32> -> vector<16x128xf32>
    %37 = vector.broadcast %9 : vector<16x1xf32> to vector<16x128xf32>
    %38 = arith.addf %36, %37 : vector<16x128xf32>
    %cst_12 = arith.constant 0.000000e+00 : f32
    %39 = vector.broadcast %cst_12 : f32 to vector<16x128xf32>
    %40 = arith.maximumf %38, %39 : vector<16x128xf32>
    %41 = vector.broadcast %10 : vector<16x1xf32> to vector<16x128xf32>
    %42 = arith.mulf %41, %40 : vector<16x128xf32>
    %cst_13 = arith.constant dense<0.000000e+00> : vector<128xf32>
    %43 = vector.multi_reduction <add>, %42, %cst_13 [0] : vector<16x128xf32> to vector<128xf32>
    %44 = vector.shape_cast %43 : vector<128xf32> to vector<1x128xf32>
    %45 = vector.broadcast %11 : vector<1x1xf32> to vector<1x128xf32>
    %46 = arith.addf %44, %45 : vector<1x128xf32>
    %c0_14 = arith.constant 0 : index
    %c0_15 = arith.constant 0 : index
    %47 = vector.load %arg4[%c0_14, %c0_15] : memref<1x128xf32, #tpu.memory_space<vmem>>, vector<1x128xf32>
    tpu.vector_store %arg4[%c0_14, %c0_15], %46 {strides = array<i32>} : memref<1x128xf32, #tpu.memory_space<vmem>>, vector<1x128xf32>,
    return
  }
  func.func @transform_0(%arg0: i32) -> (i32, i32) {
    %c0_i32 = arith.constant 0 : i32
    %c0_i32_0 = arith.constant 0 : i32
    return %c0_i32, %arg0 : i32, i32
  }
  func.func @transform_1(%arg0: i32) -> (i32, i32) {
    %c0_i32 = arith.constant 0 : i32
    %c0_i32_0 = arith.constant 0 : i32
    return %c0_i32, %arg0 : i32, i32
  }
  func.func @transform_2(%arg0: i32) -> (i32, i32) {
    %c0_i32 = arith.constant 0 : i32
    %c0_i32_0 = arith.constant 0 : i32
    %c0_i32_1 = arith.constant 0 : i32
    return %c0_i32, %c0_i32_0 : i32, i32
  }
  func.func @transform_3(%arg0: i32) -> (i32, i32) {
    %c0_i32 = arith.constant 0 : i32
    %c0_i32_0 = arith.constant 0 : i32
    return %c0_i32, %arg0 : i32, i32
  }
}

</mosaic_0001>

<llo_original>
// kernel: q_forward_batch.1
$region0: #{q_forward_batch.1}
  #allocation0 [shape = 'u32[]', space=smem, size = 0x4, offset = 0x4, fixed_abs, tag = 'smem constant byte address 0x4 - core index']
  #allocation1 [shape = 'u32[72,128]{1,0:T(1,128)}', space=vmem, size = 0x9000, scoped, tag = 'internal scratch']
  %s0 = inlined_call_operand.vmem [shape: s32[1,256], index: 0, kind: input, shape index: {}]
  %s1 = inlined_call_operand.vmem [shape: f32[16,256], index: 1, kind: input, shape index: {}]
  %s2 = inlined_call_operand.vmem [shape: f32[64,26], index: 2, kind: input, shape index: {}]
  %s3 = inlined_call_operand.hbm [shape: f32[1,256], index: 3, kind: output, shape index: {}]
  %s4 = sld [smem:[#allocation0]]
  $region83: #{q_forward_batch.1} parent=0
    _
  %s6 = ssub.s32 1, %s4
  %s7 = scalar_select 0, %s6, %s4
  $region1: #{q_forward_batch.1} parent=0
    #allocation2 [shape = 'u8[16384]{0}', space=vmem, size = 0x4000, scoped, tag = 'input window, operand 1']
    #allocation3 [shape = 'u8[1024]{0}', space=vmem, size = 0x400, scoped, tag = 'output window, operand 0']
    #allocation4 [shape = 's32[2]{0}', space=sflag, size = 0x8, scoped, tag = 'scoped memory for q_forward_batch.1']
    %8 = vsyncpa [#allocation4], 0
    %s9 = scalar_lea.sflag [#allocation4], 1
    %10 = vsyncpa %s9, 0
    loop: start=0, step=1, limit=4
    $region2: #{q_forward_batch.1} parent=1 // loop_pre_header
      _
    $region3: #{q_forward_batch.1} parent=1 // loop_header
      %s12 = sphi 0, %s16
      %p13 = scmp.ge.s32.totalorder %s12, 4
      %s22 = sphi 0, %s24
      %s25 = sphi 0, %s22
      %s26 = sphi 0, %s25
      %s42 = sphi 0, %s26
      %s48 = sphi 0, %s50
      %s51 = sphi 0, %s48
      %s52 = sphi 0, %s51
      %s68 = sphi 0, %s52
      %s72 = sphi 0, %s72
      %s74 = sphi 0, %s72
      %s75 = sphi 0, %s74
      %s89 = sphi 0, %s75
      %s95 = sphi 0, %s97
      %s98 = sphi 0, %s95
      %s99 = sphi 0, %s98
      %s115 = sphi 0, %s99
    $region4: #{q_forward_batch.1} parent=1 // loop_header_branch
      %15 = sbr.rel (%p13) target = $region8
    $region5: #{q_forward_batch.1} parent=1 // loop_body
      %s17 = ssub.s32 %s12, 1
      %s18 = ssub.s32 %s12, 2
      %s19 = sadd.s32 %s12, 1
      %s20 = ssub.s32 %s12, %s19
      %p21 = scmp.eq.s32.totalorder %s20, 0
      %s23 = sadd.s32 %s22, 1
      %s24 = scalar_select %p21, %s22, %s23
      %p27 = pneg %p21
      %p28 = scmp.eq.s32.totalorder %s12, 1
      %p29 = por %p27, %p28
      %p30 = scmp.ne.s32.totalorder %s22, %s25
      %p31 = scmp.eq.s32.totalorder %s12, 0
      %p32 = por %p30, %p31
      %p33 = scmp.ne.s32.totalorder %s22, %s25
      %p34 = scmp.eq.s32.totalorder %s17, 1
      %p35 = por %p33, %p34
      %p36 = scmp.ne.s32.totalorder %s25, %s26
      %p37 = scmp.eq.s32.totalorder %s17, 0
      %p38 = por %p36, %p37
      %p39 = scmp.ne.s32.totalorder %s25, %s26
      %p40 = scmp.eq.s32.totalorder %s18, 1
      %p41 = por %p39, %p40
      %p43 = scmp.ne.s32.totalorder %s26, %s42
      %p44 = scmp.eq.s32.totalorder %s18, 0
      %p45 = por %p43, %p44
      %s46 = ssub.s32 %s12, %s19
      %p47 = scmp.eq.s32.totalorder %s46, 0
      %s49 = sadd.s32 %s48, 1
      %s50 = scalar_select %p47, %s48, %s49
      %p53 = pneg %p47
      %p54 = scmp.eq.s32.totalorder %s12, 1
      %p55 = por %p53, %p54
      %p56 = scmp.ne.s32.totalorder %s48, %s51
      %p57 = scmp.eq.s32.totalorder %s12, 0
      %p58 = por %p56, %p57
      %p59 = scmp.ne.s32.totalorder %s48, %s51
      %p60 = scmp.eq.s32.totalorder %s17, 1
      %p61 = por %p59, %p60
      %p62 = scmp.ne.s32.totalorder %s51, %s52
      %p63 = scmp.eq.s32.totalorder %s17, 0
      %p64 = por %p62, %p63
      %p65 = scmp.ne.s32.totalorder %s51, %s52
      %p66 = scmp.eq.s32.totalorder %s18, 1
      %p67 = por %p65, %p66
      %p69 = scmp.ne.s32.totalorder %s52, %s68
      %p70 = scmp.eq.s32.totalorder %s18, 0
      %p71 = por %p69, %p70
      %s73 = sadd.s32 %s72, 1
      %p76 = scmp.eq.s32.totalorder %s12, 1
      %p77 = scmp.ne.s32.totalorder %s72, %s74
      %p78 = scmp.eq.s32.totalorder %s12, 0
      %p79 = por %p77, %p78
      %p80 = scmp.ne.s32.totalorder %s72, %s74
      %p81 = scmp.eq.s32.totalorder %s17, 1
      %p82 = por %p80, %p81
      %p83 = scmp.ne.s32.totalorder %s74, %s75
      %p84 = scmp.eq.s32.totalorder %s17, 0
      %p85 = por %p83, %p84
      %p86 = scmp.ne.s32.totalorder %s74, %s75
      %p87 = scmp.eq.s32.totalorder %s18, 1
      %p88 = por %p86, %p87
      %p90 = scmp.ne.s32.totalorder %s75, %s89
      %p91 = scmp.eq.s32.totalorder %s18, 0
      %p92 = por %p90, %p91
      %s93 = ssub.s32 %s12, %s19
      %p94 = scmp.eq.s32.totalorder %s93, 0
      %s96 = sadd.s32 %s95, 1
      %s97 = scalar_select %p94, %s95, %s96
      %p100 = pneg %p94
      %p101 = scmp.eq.s32.totalorder %s12, 1
      %p102 = por %p100, %p101
      %p103 = scmp.ne.s32.totalorder %s95, %s98
      %p104 = scmp.eq.s32.totalorder %s12, 0
      %p105 = por %p103, %p104
      %p106 = scmp.ne.s32.totalorder %s95, %s98
      %p107 = scmp.eq.s32.totalorder %s17, 1
      %p108 = por %p106, %p107
      %p109 = scmp.ne.s32.totalorder %s98, %s99
      %p110 = scmp.eq.s32.totalorder %s17, 0
      %p111 = por %p109, %p110
      %p112 = scmp.ne.s32.totalorder %s98, %s99
      %p113 = scmp.eq.s32.totalorder %s18, 1
      %p114 = por %p112, %p113
      %p116 = scmp.ne.s32.totalorder %s99, %s115
      %p117 = scmp.eq.s32.totalorder %s18, 0
      %p118 = por %p116, %p117
      %p119 = scmp.le.s32.totalorder 1, %s12
      %p120 = scmp.lt.s32.totalorder %s12, 3
      %p121 = pnand %p119, %p120
      %p122 = pneg %p121
      // Predicated region
      $region9: #{q_forward_batch.1} parent=5 // pred_check
        _
      $region10: #{q_forward_batch.1} parent=5 // pred_check_branch
        %124 = sbr.rel (%p121) target = $region12
      $region11: #{q_forward_batch.1} parent=5 // pred_region
        %s125 = ssub.s32 %s12, 1
        // Predicated region
        $region13: #{q_forward_batch.1} parent=11 // pred_check
          %p126 = pneg %p85
        $region14: #{q_forward_batch.1} parent=11 // pred_check_branch
          %128 = sbr.rel (%p126) target = $region16
        $region15: #{q_forward_batch.1} parent=11 // pred_region
          _
        $region16: #{q_forward_batch.1} parent=11 // pred_fallthru
          _
      $region12: #{q_forward_batch.1} parent=5 // pred_fallthru
        _
      %p129 = scmp.lt.s32.totalorder %s12, 2
      // Predicated region
      $region17: #{q_forward_batch.1} parent=5 // pred_check
        %p130 = pneg %p129
      $region18: #{q_forward_batch.1} parent=5 // pred_check_branch
        %132 = sbr.rel (%p130) target = $region20
      $region19: #{q_forward_batch.1} parent=5 // pred_region
        // Predicated region
        $region21: #{q_forward_batch.1} parent=19 // pred_check
          %p133 = pneg %p32
        $region22: #{q_forward_batch.1} parent=19 // pred_check_branch
          %135 = sbr.rel (%p133) target = $region24
        $region23: #{q_forward_batch.1} parent=19 // pred_region
          %p136 = scmp.lt.s32.totalorder %s12, 1
          %s137 = scalar_select %p136, %s12, 1
          %s138 = scalar_lea.vmem %s0, %s137
        $region24: #{q_forward_batch.1} parent=19 // pred_fallthru
          _
        // Predicated region
        $region25: #{q_forward_batch.1} parent=19 // pred_check
          %p139 = pneg %p58
        $region26: #{q_forward_batch.1} parent=19 // pred_check_branch
          %141 = sbr.rel (%p139) target = $region28
        $region27: #{q_forward_batch.1} parent=19 // pred_region
          %s142 = sand.u32 %s48, 1
          %s143 = sand.u32 %s48, 1
          %s144 = smul.addr %s143, 16
          %s145 = scalar_lea.vmem [#allocation2], %s144
          %s146 = smul.addr %s12, 8
          %s147 = scalar_lea.vmem %s1, %s146
          // Predicated region
          $region29: #{q_forward_batch.1} parent=27 // pred_check
            _
          $region30: #{q_forward_batch.1} parent=27 // pred_check_branch
            %149 = sbr.rel (0) target = $region32
          $region31: #{q_forward_batch.1} parent=27 // pred_region
            // Predicated region
            $region33: #{q_forward_batch.1} parent=31 // pred_check
              _
            $region34: #{q_forward_batch.1} parent=31 // pred_check_branch
              %151 = sbr.rel (0) target = $region36
            $region35: #{q_forward_batch.1} parent=31 // pred_region
              // Predicated region
              $region48: #{q_forward_batch.1} parent=35 // pred_check
                _
              $region49: #{q_forward_batch.1} parent=35 // pred_check_branch
                %169 = sbr.rel (0) target = $region51
              $region50: #{q_forward_batch.1} parent=35 // pred_region
                loop: start=0, step=1, limit=1
                $region52: #{q_forward_batch.1} parent=50 // loop_pre_header
                  _
                $region53: #{q_forward_batch.1} parent=50 // loop_header
                  %s171 = sphi 0, %s175
                  %p172 = scmp.ge.s32.totalorder %s171, 1
                  %s176 = sphi %s147, %s147
                  %s177 = sphi %s145, %s145
                $region54: #{q_forward_batch.1} parent=50 // loop_header_branch
                  %174 = sbr.rel (%p172) target = $region58
                $region55: #{q_forward_batch.1} parent=50 // loop_body
                  %v178 = vld [vmem:[%s176] sm:$0xff]
                  %179 = vst [vmem:[%s177] sm:$0xff] %v178
                  %v180 = vld [vmem:[%s176 + $0x10] sm:$0xff]
                  %181 = vst [vmem:[%s177 + $0x8] sm:$0xff] %v180
                $region56: #{q_forward_batch.1} parent=50 // loop_footer
                  %s175 = sadd.s32 1, %s171
                $region57: #{q_forward_batch.1} parent=50 // loop_footer_branch
                  %170 = sbr.rel target = $region53
                $region58: #{q_forward_batch.1} parent=50 // loop_exit
                  _
              $region51: #{q_forward_batch.1} parent=35 // pred_fallthru
                _
              // Predicated region
              $region59: #{q_forward_batch.1} parent=35 // pred_check
                _
              $region60: #{q_forward_batch.1} parent=35 // pred_check_branch
                %183 = sbr.rel target = $region62
              $region61: #{q_forward_batch.1} parent=35 // pred_region
                _
              $region62: #{q_forward_batch.1} parent=35 // pred_fallthru
                _
            $region36: #{q_forward_batch.1} parent=31 // pred_fallthru
              _
            // Predicated region
            $region37: #{q_forward_batch.1} parent=31 // pred_check
              _
            $region38: #{q_forward_batch.1} parent=31 // pred_check_branch
              %153 = sbr.rel target = $region40
            $region39: #{q_forward_batch.1} parent=31 // pred_region
              %s155 = ssub.s32 256, 1
              loop: start=0, step=1, limit=1
              $region41: #{q_forward_batch.1} parent=39 // loop_pre_header
                _
              $region42: #{q_forward_batch.1} parent=39 // loop_header
                %s157 = sphi 0, %s161
                %p158 = scmp.ge.s32.totalorder %s157, 1
                %s162 = sphi %s147, %s147
                %s163 = sphi %s145, %s145
              $region43: #{q_forward_batch.1} parent=39 // loop_header_branch
                %160 = sbr.rel (%p158) target = $region47
              $region44: #{q_forward_batch.1} parent=39 // loop_body
                %v164 = vld [vmem:[%s162] sm:%s155]
                %165 = vst [vmem:[%s163] sm:%s155] %v164
                %v166 = vld [vmem:[%s162 + $0x10] sm:%s155]
                %167 = vst [vmem:[%s163 + $0x8] sm:%s155] %v166
              $region45: #{q_forward_batch.1} parent=39 // loop_footer
                %s161 = sadd.s32 1, %s157
              $region46: #{q_forward_batch.1} parent=39 // loop_footer_branch
                %156 = sbr.rel target = $region42
              $region47: #{q_forward_batch.1} parent=39 // loop_exit
                _
            $region40: #{q_forward_batch.1} parent=31 // pred_fallthru
              _
          $region32: #{q_forward_batch.1} parent=27 // pred_fallthru
            _
          %184 = vnop
        $region28: #{q_forward_batch.1} parent=19 // pred_fallthru
          _
      $region20: #{q_forward_batch.1} parent=5 // pred_fallthru
        _
      %p185 = scmp.le.s32.totalorder 1, %s12
      %p186 = scmp.lt.s32.totalorder %s12, 3
      %p187 = pnand %p185, %p186
      %p188 = pneg %p187
      // Predicated region
      $region63: #{q_forward_batch.1} parent=5 // pred_check
        _
      $region64: #{q_forward_batch.1} parent=5 // pred_check_branch
        %190 = sbr.rel (%p187) target = $region66
      $region65: #{q_forward_batch.1} parent=5 // pred_region
        %s191 = ssub.s32 %s12, 1
        %s192 = sand.u32 %s51, 1
        %s193 = sand.u32 %s51, 1
        %s194 = smul.addr %s193, 16
        %s195 = scalar_lea.vmem [#allocation2], %s194
        // Predicated region
        $region67: #{q_forward_batch.1} parent=65 // pred_check
          %p196 = pneg %p64
        $region68: #{q_forward_batch.1} parent=65 // pred_check_branch
          %198 = sbr.rel (%p196) target = $region70
        $region69: #{q_forward_batch.1} parent=65 // pred_region
          _
        $region70: #{q_forward_batch.1} parent=65 // pred_fallthru
          _
        %p199 = scmp.lt.s32.totalorder %s17, 1
        %s200 = scalar_select %p199, %s17, 1
        %s201 = scalar_lea.vmem %s0, %s200
        %p202 = pneg %p38
        %p203 = pneg %p35
        %s204 = sand.u32 %s51, 1
        %s205 = sand.u32 %s51, 1
        %s206 = smul.addr %s205, 16
        %s207 = scalar_lea.vmem [#allocation2], %s206
        %p208 = pneg %p64
        %p209 = pneg %p61
        %p210 = pneg %p85
        %p211 = pneg %p82
        %p212 = pneg %p111
        %p213 = pneg %p108
        %s214 = sand.u32 %s98, 1
        %s215 = scalar_lea.sflag [#allocation4], %s214
        %s216 = sand.u32 %s98, 1
        %s217 = scalar_lea.vmem [#allocation3], %s216
        %p218 = scmp.lt.s32.totalorder %s17, 1
        %s219 = scalar_select %p218, %s17, 1
        %s220 = scalar_lea.vmem %s0, %s219
        %v221 = vld [vmem:[%s2] sm:$0xff]
        %v222 = vld [vmem:[%s2 + $0x8] sm:$0xff]
        %v223 = vld [vmem:[%s2 + $0x10] sm:$0xff]
        %v224 = vld [vmem:[%s2 + $0x18] sm:$0xff]
        %v225 = vld [vmem:[%s2 + $0x20] sm:$0xff]
        %v226 = vld [vmem:[%s2 + $0x28] sm:$0xff]
        %v227 = vld [vmem:[%s2 + $0x30] sm:$0xff]
        %v228 = vld [vmem:[%s2 + $0x38] sm:$0xff]
        %v229 = vld [vmem:[%s220] sm:$0x1]
        %v230 = vlaneseq
        %v231 = vshrl.u32 %v230, 7
        %v232 = vperm.slane %v229, 0
        %vm233 = vcmp.eq.s32.totalorder %v231, %v232
        %v234 = vsel %vm233, 1, 0
        %v235 = vcvt.s32.f32 %v234
        %v236 = vld [vmem:[%s195] sm:$0xff]
        %v237 = vld [vmem:[%s195 + $0x8] sm:$0xff]
        %240 = vrot.lane.b32.xlu0 %v221, 112
        %v241 = vpop.permute.xlu0 %240
        %242 = vrot.lane.b32.xlu0 %v222, 112
        %v243 = vpop.permute.xlu0 %242
        %vm244 = vcmask 31744
        %v245 = vsel %vm244, %v241, 0
        %v247 = vsel %vm244, %v243, 0
        %vm249 = vcmask 1043456
        %v251 = vsel %vm249, %v235, 0
        %253 = vmatpush.msra.mxu0 0.0
        %254 = vmatpush.msra.mxu0 0.0
        %255 = vmatpush.msra.mxu0 0.0
        %256 = vmatpush.msra.mxu0 0.0
        %257 = vmatpush.msra.mxu0 0.0
        %258 = vmatpush.msra.mxu0 0.0
        %259 = vmatpush.msra.mxu0 0.0
        %260 = vmatpush.msra.mxu0 0.0
        %261 = vmatpush.msra.mxu0 0.0
        %262 = vmatpush.msra.mxu0 0.0
        %263 = vmatpush.msra.mxu0 0.0
        %264 = vmatpush.msra.mxu0 0.0
        %265 = vmatpush.msra.mxu0 0.0
        %266 = vmatpush.msra.mxu0 0.0
        %267 = vmatpush.msra.mxu0 0.0
        %268 = vmatpush.msra.mxu0 %v251
        %269 = vmatmul.f32.gmra.mxu0 %v245
        %v270 = vpop.f32.mrf.mxu0
        %v271 = vadd.f32 0.0, %v270
        %272 = vmatmul.f32.gmra.mxu0 %v247
        %v273 = vpop.f32.mrf.mxu0
        %v274 = vadd.f32 0.0, %v273
        %275 = vdwg.mxu0
        %vm276 = vcmask 130048
        %v277 = vsel %vm276, %v221, 0
        %v279 = vsel %vm276, %v222, 0
        %281 = vmatpush.msra.mxu0 0.0
        %282 = vmatpush.msra.mxu0 0.0
        %283 = vmatpush.msra.mxu0 0.0
        %284 = vmatpush.msra.mxu0 0.0
        %285 = vmatpush.msra.mxu0 0.0
        %286 = vmatpush.msra.mxu0 0.0
        %287 = vmatpush.msra.mxu0 0.0
        %288 = vmatpush.msra.mxu0 0.0
        %289 = vmatpush.msra.mxu0 0.0
        %290 = vmatpush.msra.mxu0 0.0
        %291 = vmatpush.msra.mxu0 0.0
        %292 = vmatpush.msra.mxu0 0.0
        %293 = vmatpush.msra.mxu0 0.0
        %294 = vmatpush.msra.mxu0 0.0
        %295 = vmatpush.msra.mxu0 %v237
        %296 = vmatpush.msra.mxu0 %v236
        %297 = vmatmul.f32.gmra.mxu0 %v277
        %v298 = vpop.f32.mrf.mxu0
        %v299 = vadd.f32 %v271, %v298
        %300 = vmatmul.f32.gmra.mxu0 %v279
        %v301 = vpop.f32.mrf.mxu0
        %v302 = vadd.f32 %v274, %v301
        %303 = vdwg.mxu0
        %304 = vset.pattern.permute.xlu0 20
        %305 = vperm.xlu0 %304, %v221
        %v306 = vpop.permute.xlu0 %305
        %308 = vset.pattern.permute.xlu0 20
        %309 = vperm.xlu0 %308, %v222
        %v310 = vpop.permute.xlu0 %309
        %v312 = vadd.f32 %v299, %v306
        %v313 = vadd.f32 %v302, %v310
        %v314 = vmax.f32 %v312, 0.0
        %v315 = vmax.f32 %v313, 0.0
        %316 = vset.pattern.permute.xlu0 21
        %317 = vperm.xlu0 %316, %v221
        %v318 = vpop.permute.xlu0 %317
        %320 = vset.pattern.permute.xlu0 21
        %321 = vperm.xlu0 %320, %v222
        %v322 = vpop.permute.xlu0 %321
        %v325 = vsel %vm276, %v223, 0
        %v328 = vsel %vm276, %v224, 0
        %330 = vmatpush.msra.mxu0 0.0
        %331 = vmatpush.msra.mxu0 0.0
        %332 = vmatpush.msra.mxu0 0.0
        %333 = vmatpush.msra.mxu0 0.0
        %334 = vmatpush.msra.mxu0 0.0
        %335 = vmatpush.msra.mxu0 0.0
        %336 = vmatpush.msra.mxu0 0.0
        %337 = vmatpush.msra.mxu0 0.0
        %338 = vmatpush.msra.mxu0 0.0
        %339 = vmatpush.msra.mxu0 0.0
        %340 = vmatpush.msra.mxu0 0.0
        %341 = vmatpush.msra.mxu0 0.0
        %342 = vmatpush.msra.mxu0 0.0
        %343 = vmatpush.msra.mxu0 0.0
        %344 = vmatpush.msra.mxu0 %v315
        %345 = vmatpush.msra.mxu0 %v314
        %346 = vmatmul.f32.gmra.mxu0 %v325
        %v347 = vpop.f32.mrf.mxu0
        %v348 = vadd.f32 %v318, %v347
        %349 = vmatmul.f32.gmra.mxu0 %v328
        %v350 = vpop.f32.mrf.mxu0
        %v351 = vadd.f32 %v322, %v350
        %352 = vdwg.mxu0
        %v353 = vmax.f32 %v348, 0.0
        %v354 = vmax.f32 %v351, 0.0
        %355 = vset.pattern.permute.xlu0 22
        %356 = vperm.xlu0 %355, %v221
        %v357 = vpop.permute.xlu0 %356
        %359 = vset.pattern.permute.xlu0 22
        %360 = vperm.xlu0 %359, %v222
        %v361 = vpop.permute.xlu0 %360
        %v364 = vsel %vm276, %v225, 0
        %v367 = vsel %vm276, %v226, 0
        %369 = vmatpush.msra.mxu0 0.0
        %370 = vmatpush.msra.mxu0 0.0
        %371 = vmatpush.msra.mxu0 0.0
        %372 = vmatpush.msra.mxu0 0.0
        %373 = vmatpush.msra.mxu0 0.0
        %374 = vmatpush.msra.mxu0 0.0
        %375 = vmatpush.msra.mxu0 0.0
        %376 = vmatpush.msra.mxu0 0.0
        %377 = vmatpush.msra.mxu0 0.0
        %378 = vmatpush.msra.mxu0 0.0
        %379 = vmatpush.msra.mxu0 0.0
        %380 = vmatpush.msra.mxu0 0.0
        %381 = vmatpush.msra.mxu0 0.0
        %382 = vmatpush.msra.mxu0 0.0
        %383 = vmatpush.msra.mxu0 %v354
        %384 = vmatpush.msra.mxu0 %v353
        %385 = vmatmul.f32.gmra.mxu0 %v364
        %v386 = vpop.f32.mrf.mxu0
        %v387 = vadd.f32 %v357, %v386
        %388 = vmatmul.f32.gmra.mxu0 %v367
        %v389 = vpop.f32.mrf.mxu0
        %v390 = vadd.f32 %v361, %v389
        %391 = vdwg.mxu0
        %v392 = vmax.f32 %v387, 0.0
        %v393 = vmax.f32 %v390, 0.0
        %394 = vset.pattern.permute.xlu0 23
        %395 = vperm.xlu0 %394, %v221
        %v396 = vpop.permute.xlu0 %395
        %398 = vset.pattern.permute.xlu0 23
        %399 = vperm.xlu0 %398, %v222
        %v400 = vpop.permute.xlu0 %399
        %v403 = vsel %vm276, %v227, 0
        %v406 = vsel %vm276, %v228, 0
        %408 = vmatpush.msra.mxu0 0.0
        %409 = vmatpush.msra.mxu0 0.0
        %410 = vmatpush.msra.mxu0 0.0
        %411 = vmatpush.msra.mxu0 0.0
        %412 = vmatpush.msra.mxu0 0.0
        %413 = vmatpush.msra.mxu0 0.0
        %414 = vmatpush.msra.mxu0 0.0
        %415 = vmatpush.msra.mxu0 0.0
        %416 = vmatpush.msra.mxu0 0.0
        %417 = vmatpush.msra.mxu0 0.0
        %418 = vmatpush.msra.mxu0 0.0
        %419 = vmatpush.msra.mxu0 0.0
        %420 = vmatpush.msra.mxu0 0.0
        %421 = vmatpush.msra.mxu0 0.0
        %422 = vmatpush.msra.mxu0 %v393
        %423 = vmatpush.msra.mxu0 %v392
        %424 = vmatmul.f32.gmra.mxu0 %v403
        %v425 = vpop.f32.mrf.mxu0
        %v426 = vadd.f32 %v396, %v425
        %427 = vmatmul.f32.gmra.mxu0 %v406
        %v428 = vpop.f32.mrf.mxu0
        %v429 = vadd.f32 %v400, %v428
        %430 = vdwg.mxu0
        %v431 = vmax.f32 %v426, 0.0
        %v432 = vmax.f32 %v429, 0.0
        %433 = vset.pattern.permute.xlu0 24
        %434 = vperm.xlu0 %433, %v221
        %v435 = vpop.permute.xlu0 %434
        %437 = vset.pattern.permute.xlu0 24
        %438 = vperm.xlu0 %437, %v222
        %v439 = vpop.permute.xlu0 %438
        %v441 = vmul.f32 %v435, %v431
        %v442 = vmul.f32 %v439, %v432
        %v443 = vadd.f32 %v441, %v442
        %v444 = vrot.slane %v443, 4
        %v445 = vadd.f32 %v443, %v444
        %v446 = vrot.slane %v445, 2
        %v447 = vadd.f32 %v445, %v446
        %v448 = vrot.slane %v447, 1
        %v449 = vadd.f32 %v447, %v448
        %450 = vset.pattern.permute.xlu0 25
        %451 = vperm.xlu0 %450, %v221
        %v452 = vpop.permute.xlu0 %451
        %v454 = vadd.f32 %v449, %v452
        %455 = vst [vmem:[%s217] sm:$0x1] %v454
        %s456 = sand.u32 %s98, 1
        %s457 = scalar_lea.sflag [#allocation4], %s456
        %s458 = sand.u32 %s98, 1
        %s459 = scalar_lea.vmem [#allocation3], %s458
        // Predicated region
        $region71: #{q_forward_batch.1} parent=65 // pred_check
          %p460 = pneg %p108
        $region72: #{q_forward_batch.1} parent=65 // pred_check_branch
          %462 = sbr.rel (%p460) target = $region74
        $region73: #{q_forward_batch.1} parent=65 // pred_region
          %464 = vsyncadd %s457, 0
          %s465 = scalar_lea.hbm %s3, %s17
          %s467 = sshll.u32 %s459, 4
          %s468 = int_to_ptr.vmem [resolvable:$true] %s467
          %s469 = sshll.u32 %s465, 4
          %s470 = int_to_ptr.hbm [resolvable:$true] %s469
          %472 = dma.vmem_to_hbm [thread:$0]  %s468, 16, %s470, %s457
        $region74: #{q_forward_batch.1} parent=65 // pred_fallthru
          _
      $region66: #{q_forward_batch.1} parent=5 // pred_fallthru
        _
      %p473 = scmp.le.s32.totalorder 2, %s12
      // Predicated region
      $region75: #{q_forward_batch.1} parent=5 // pred_check
        %p474 = pneg %p473
      $region76: #{q_forward_batch.1} parent=5 // pred_check_branch
        %476 = sbr.rel (%p474) target = $region78
      $region77: #{q_forward_batch.1} parent=5 // pred_region
        %s477 = ssub.s32 %s12, 2
        // Predicated region
        $region79: #{q_forward_batch.1} parent=77 // pred_check
          %p478 = pneg %p114
        $region80: #{q_forward_batch.1} parent=77 // pred_check_branch
          %480 = sbr.rel (%p478) target = $region82
        $region81: #{q_forward_batch.1} parent=77 // pred_region
          %s481 = sand.u32 %s99, 1
          %s482 = scalar_lea.sflag [#allocation4], %s481
          %s483 = sand.u32 %s99, 1
          %s484 = scalar_lea.vmem [#allocation3], %s483
          %486 = dma.done %s482, 16
        $region82: #{q_forward_batch.1} parent=77 // pred_fallthru
          _
      $region78: #{q_forward_batch.1} parent=5 // pred_fallthru
        _
    $region6: #{q_forward_batch.1} parent=1 // loop_footer
      %s16 = sadd.s32 1, %s12
    $region7: #{q_forward_batch.1} parent=1 // loop_footer_branch
      %11 = sbr.rel target = $region3
    $region8: #{q_forward_batch.1} parent=1 // loop_exit
      _
    %487 = vsyncpa [#allocation4], 1
    %s488 = scalar_lea.sflag [#allocation4], 1
    %489 = vsyncpa %s488, 1

</llo_original>
